<compile_context>
chip_gen: v6e
topology: v6e:2x2x1
jax: 0.10.0
libtpu: 0.0.40
codegen_flags: <defaults>
</compile_context>

<pallas_src>
import functools
import math

import jax
import jax.numpy as jnp
from jax.experimental import pallas as pl
from jax.experimental.pallas import tpu as pltpu


# --------------------------- chip-dependent tiling ---------------------------

def _round_up(x, m):
    return ((x + m - 1) // m) * m


def _detect_vmem_bytes():
    """Conservative VMEM-capacity guess from the device kind (v7x-safe default)."""
    try:
        kind = jax.devices()[0].device_kind.lower()
    except Exception:
        return 64 << 20
    if ("v5 lite" in kind) or ("v5e" in kind) or ("v6" in kind):
        return 128 << 20
    return 64 << 20          # v7x (64 MiB / TC) and unknown chips


@functools.lru_cache(maxsize=None)
def _chip_caps():
    if _detect_vmem_bytes() >= (100 << 20):
        # v5e / v6e: 128 MiB physical VMEM -> big tiles, deep residency
        return dict(tm=512, tn=512, tk=1024, tq=256, tkv=512, ln_rows=1024,
                    vmem_limit=100 << 20)
    # v7x: only 64 MiB VMEM but 3.2 TB/s HBM -> smaller footprint
    return dict(tm=256, tn=512, tk=512, tq=256, tkv=256, ln_rows=512,
                vmem_limit=48 << 20)


def _tile(dim, cap, align):
    """Largest tile <= cap that divides dim and is `align`-aligned (or full dim)."""
    if dim <= cap:
        return dim
    t = (cap // align) * align
    while t >= align:
        if dim % t == 0:
            return t
        t -= align
    return dim   # fallback (only hit for pathological dims; see _tile_and_pad)


def _tile_and_pad(dim, cap, align):
    """(tile, padded_dim): prefer an exact divisor, otherwise pad up to `cap`."""
    if dim <= cap:
        return dim, dim
    t = (cap // align) * align
    while t >= align:
        if dim % t == 0:
            return t, dim
        t -= align
    return cap, _round_up(dim, cap)


# --------------------------- tiled fused matmul ------------------------------

def _matmul_kernel(*refs, activation, has_residual):
    if has_residual:
        x_ref, w_ref, b_ref, r_ref, o_ref, acc_ref = refs
    else:
        x_ref, w_ref, b_ref, o_ref, acc_ref = refs
    k = pl.program_id(2)

    @pl.when(k == 0)
    def _():
        acc_ref[...] = jnp.zeros_like(acc_ref)

    # bf16 x bf16 on the MXU, f32 VMEM accumulator; w is stored (K, N).
    acc_ref[...] += jnp.dot(x_ref[...], w_ref[...],
                            preferred_element_type=jnp.float32)

    @pl.when(k == pl.num_programs(2) - 1)
    def _():
        y = acc_ref[...] + b_ref[...].astype(jnp.float32)
        if activation == "gelu":                 # exact erf gelu (matches F.gelu)
            y = 0.5 * y * (1.0 + jax.lax.erf(y * 0.7071067811865476))
        if has_residual:                         # fused residual add -> new stream
            y = y + r_ref[...]
        o_ref[...] = y.astype(o_ref.dtype)


def linear(x, w_kn, b=None, activation=None, residual=None,
           out_dtype=jnp.bfloat16, caps=None):
    """y = act(x @ w + b) (+ residual). x: (M,K) bf16; w_kn: (K,N) bf16."""
    caps = caps or _chip_caps()
    M, K = x.shape
    Kw, N = w_kn.shape
    assert K == Kw
    x = x.astype(jnp.bfloat16)

    tm, Mp = _tile_and_pad(M, caps["tm"], 8)
    tn, Np = _tile_and_pad(N, caps["tn"], 128)
    tk, Kp = _tile_and_pad(K, caps["tk"], 128)

    if (Mp, Kp) != (M, K):
        x = jnp.pad(x, ((0, Mp - M), (0, Kp - K)))
    if (Kp, Np) != (K, N):
        w_kn = jnp.pad(w_kn, ((0, Kp - K), (0, Np - N)))
    if b is None:
        b2 = jnp.zeros((1, Np), jnp.float32)
    else:
        bb = jnp.pad(b, (0, Np - N)) if Np != N else b
        b2 = bb.reshape(1, Np).astype(jnp.float32)

    args = [x, w_kn, b2]
    in_specs = [pl.BlockSpec((tm, tk), lambda i, j, k: (i, k)),
                pl.BlockSpec((tk, tn), lambda i, j, k: (k, j)),
                pl.BlockSpec((1, tn), lambda i, j, k: (0, j))]
    if residual is not None:
        r = residual.astype(jnp.float32)
        if (Mp, Np) != (M, N):
            r = jnp.pad(r, ((0, Mp - M), (0, Np - N)))
        args.append(r)
        in_specs.append(pl.BlockSpec((tm, tn), lambda i, j, k: (i, j)))

    grid = (Mp // tm, Np // tn, Kp // tk)
    out = pl.pallas_call(
        functools.partial(_matmul_kernel, activation=activation,
                          has_residual=residual is not None),
        out_shape=jax.ShapeDtypeStruct((Mp, Np), out_dtype),
        grid=grid,
        in_specs=in_specs,
        out_specs=pl.BlockSpec((tm, tn), lambda i, j, k: (i, j)),
        scratch_shapes=[pltpu.VMEM((tm, tn), jnp.float32)],
        compiler_params=pltpu.CompilerParams(
            dimension_semantics=("parallel", "parallel", "arbitrary"),
            vmem_limit_bytes=caps["vmem_limit"]),
    )(*args)
    if (Mp, Np) != (M, N):
        out = out[:M, :N]
    return out


# ---------------------------------- LayerNorm --------------------------------

def _ln_kernel(x_ref, g_ref, b_ref, y_ref):
    r = x_ref[...].astype(jnp.float32)
    mu = jnp.mean(r, axis=-1, keepdims=True)
    var = jnp.mean((r - mu) * (r - mu), axis=-1, keepdims=True)
    y = (r - mu) * jax.lax.rsqrt(var + 1e-5)
    y_ref[...] = (y * g_ref[...] + b_ref[...]).astype(y_ref.dtype)


def layernorm(x, g, b, caps=None):
    """LayerNorm over the last dim; f32 residual in, bf16 activations out."""
    caps = caps or _chip_caps()
    M, D = x.shape
    tm, Mp = _tile_and_pad(M, caps["ln_rows"], 8)
    if Mp != M:
        x = jnp.pad(x, ((0, Mp - M), (0, 0)))
    row = pl.BlockSpec((tm, D), lambda i: (i, 0))
    vec = pl.BlockSpec((1, D), lambda i: (0, 0))
    y = pl.pallas_call(
        _ln_kernel,
        out_shape=jax.ShapeDtypeStruct((Mp, D), jnp.bfloat16),
        grid=(Mp // tm,),
        in_specs=[row, vec, vec],
        out_specs=row,
        compiler_params=pltpu.CompilerParams(
            dimension_semantics=("parallel",),
            vmem_limit_bytes=caps["vmem_limit"]),
    )(x, g.reshape(1, D), b.reshape(1, D))
    return y[:M] if Mp != M else y


# ----------------------- retention core (q-tiled, chunked) --------------------

def _retention_kernel(q_ref, k_ref, v_ref, g_ref, o_ref, acc_ref, den_ref,
                      *, heads, dk, dv, tq, tkv):
    qi = pl.program_id(1)
    c = pl.program_id(2)
    c_last = ((qi + 1) * tq - 1) // tkv          # last KV chunk this q tile needs

    @pl.when(c == 0)
    def _():
        acc_ref[...] = jnp.zeros_like(acc_ref)
        den_ref[...] = jnp.zeros_like(den_ref)

    @pl.when(c <= c_last)                         # causal chunk skip
    def _():
        q = q_ref[0]                              # (tq,  H*dk) bf16, rownorm folded in
        k = k_ref[0]                              # (tkv, H*dk) bf16
        v = v_ref[0]                              # (tkv, H*dv) bf16

        row_g = qi * tq + jax.lax.broadcasted_iota(jnp.int32, (tq, 1), 0)
        col_l = jax.lax.broadcasted_iota(jnp.int32, (1, tkv), 1)
        causal = row_g >= (c * tkv + col_l)                       # (tq, tkv)
        row_rel = (row_g - c * tkv).astype(jnp.float32)           # (tq, 1)
        col_lf = col_l.astype(jnp.float32)                        # (1, tkv)

        for h in range(heads):                    # static loop: per-head MXU passes
            r = 1.0 - 2.0 ** (-5.0 - float(h))    # decay base, compile-time constant
            log_r = math.log(r)
            # rank-1 decay: r^(i-j) = exp(log_r*(i - c*tkv)) * exp(-log_r*j_local)
            colv = jnp.exp(log_r * row_rel)
            rowv = jnp.exp(-log_r * col_lf)
            decay = jnp.where(causal, colv * rowv, 0.0)

            qh = q[:, h * dk:(h + 1) * dk]
            kh = k[:, h * dk:(h + 1) * dk]
            vh = v[:, h * dv:(h + 1) * dv]

            s = jax.lax.dot_general(qh, kh, (((1,), (1,)), ((), ())),
                                    preferred_element_type=jnp.float32)  # q @ k^T
            s = s * decay
            den_ref[h] = den_ref[h] + jnp.sum(jnp.abs(s), axis=-1, keepdims=True)
            acc_ref[h] = acc_ref[h] + jnp.dot(s.astype(jnp.bfloat16), vh,
                                              preferred_element_type=jnp.float32)

    @pl.when(c == c_last)                         # finalize once per q tile
    def _():
        outs = []
        for h in range(heads):
            num = acc_ref[h]                                   # (tq, dv) f32
            den = jnp.clip(den_ref[h], 1.0, 5e4)               # full-row clamp
            out = num * pl.reciprocal(den, approx=True)
            # per-head group norm (RMSNorm over head_dim, no affine); torchscale eps
            out = out * jax.lax.rsqrt(jnp.mean(out * out, axis=-1, keepdims=True)
                                      + 1e-5)
            outs.append(out)
        full = jnp.concatenate(outs, axis=-1)                  # (tq, H*dv), lane-dense
        gg = g_ref[0].astype(jnp.float32)
        full = full * (gg * jax.nn.sigmoid(gg))                # fused swish gate
        o_ref[0] = full.astype(o_ref.dtype)


def retention_core(q, k, v, g, *, heads, caps=None):
    """Parallel-form retention: q-tiled, KV-chunked, gate fused into finalize."""
    caps = caps or _chip_caps()
    B, T, D = q.shape
    VD = v.shape[-1]
    dk, dv = D // heads, VD // heads
    tq = _tile(T, caps["tq"], 8)
    tkv = _tile(T, caps["tkv"], 128)
    nq, nkv = T // tq, T // tkv

    def q_idx(b, qi, c):
        return (b, qi, 0)

    def kv_idx(b, qi, c):
        # clamp: KV chunks above the causal diagonal are never (re-)fetched
        return (b, jnp.minimum(c, ((qi + 1) * tq - 1) // tkv), 0)

    return pl.pallas_call(
        functools.partial(_retention_kernel, heads=heads, dk=dk, dv=dv,
                          tq=tq, tkv=tkv),
        out_shape=jax.ShapeDtypeStruct((B, T, VD), jnp.bfloat16),
        grid=(B, nq, nkv),
        in_specs=[
            pl.BlockSpec((1, tq, D), q_idx),
            pl.BlockSpec((1, tkv, D), kv_idx),
            pl.BlockSpec((1, tkv, VD), kv_idx),
            pl.BlockSpec((1, tq, VD), q_idx),
        ],
        out_specs=pl.BlockSpec((1, tq, VD), q_idx),
        scratch_shapes=[pltpu.VMEM((heads, tq, dv), jnp.float32),
                        pltpu.VMEM((heads, tq, 1), jnp.float32)],
        compiler_params=pltpu.CompilerParams(
            dimension_semantics=("parallel", "parallel", "arbitrary"),
            vmem_limit_bytes=caps["vmem_limit"]),
    )(q, k, v, g)


# ---------------------------------- JAX glue ---------------------------------

def rotate_every_two(x):
    x1 = x[..., 0::2]
    x2 = x[..., 1::2]
    return jnp.stack((-x2, x1), axis=-1).reshape(x.shape)


def theta_shift(x, sin, cos):
    return x * cos + rotate_every_two(x) * sin


def retnet_rel_pos(T, H, dk):
    """sin/cos (T,D) for xpos rotation and per-head inverse row norm (T,D)."""
    angle = 1.0 / (10000.0 ** jnp.linspace(0.0, 1.0, dk // 2))
    angle = jnp.repeat(angle, 2)                                   # (dk,)
    idx = jnp.arange(T, dtype=jnp.float32)
    sin = jnp.sin(idx[:, None] * angle[None, :])                   # (T, dk)
    cos = jnp.cos(idx[:, None] * angle[None, :])
    sin_d = jnp.tile(sin, (1, H))                                  # (T, D)
    cos_d = jnp.tile(cos, (1, H))
    # closed-form decay-mask row norm: sqrt(sum_{d=0..i} r^d) = sqrt((1-r^(i+1))/(1-r))
    r = 1.0 - 2.0 ** (-5.0 - jnp.arange(H, dtype=jnp.float32))     # (H,)
    rown = jnp.sqrt((1.0 - r[None, :] ** (idx[:, None] + 1.0)) / (1.0 - r[None, :]))
    inv_rn = jnp.repeat(1.0 / rown, dk, axis=1)                    # (T, D), head-blocked
    return sin_d, cos_d, inv_rn


def retention_block(xn, p, cfg, rel, B, T, caps):
    D, VD, H = cfg["embed_dim"], cfg["value_dim"], cfg["heads"]
    sin_d, cos_d, inv_rn = rel
    y = linear(xn, p["w_qkvg"], p["b_qkvg"], caps=caps)       # fused q|k|v|g, bf16
    q = y[:, :D].reshape(B, T, D).astype(jnp.float32)
    k = y[:, D:2 * D].reshape(B, T, D).astype(jnp.float32)
    v = y[:, 2 * D:2 * D + VD].reshape(B, T, VD)
    g = y[:, 2 * D + VD:].reshape(B, T, VD)
    # xpos rotation; the decay-mask row normalization is folded into q here so the
    # retention kernel never divides per score element.
    qr = (theta_shift(q, sin_d[None], cos_d[None]) * inv_rn[None]).astype(jnp.bfloat16)
    kr = theta_shift(k, sin_d[None], cos_d[None]).astype(jnp.bfloat16)
    o = retention_core(qr, kr, v, g, heads=H, caps=caps)      # (B,T,VD) bf16, gated
    return o.reshape(B * T, VD)


def retnet_forward(params, cfg, input_ids):
    caps = _chip_caps()
    B, T = input_ids.shape
    D, V, H = cfg["embed_dim"], cfg["vocab_size"], cfg["heads"]

    x = params["embed"][input_ids].reshape(B * T, D)          # f32 residual stream
    rel = retnet_rel_pos(T, H, D // H)

    for lp in params["layers"]:
        xn = layernorm(x, lp["ln1_g"], lp["ln1_b"], caps)
        a = retention_block(xn, lp, cfg, rel, B, T, caps)
        # out-projection with fused residual add (emits the new residual)
        x = linear(a, lp["w_o"], lp["b_o"], residual=x,
                   out_dtype=jnp.float32, caps=caps)
        xn2 = layernorm(x, lp["ln2_g"], lp["ln2_b"], caps)
        h = linear(xn2, lp["w1"], lp["b1"], activation="gelu", caps=caps)
        x = linear(h, lp["w2"], lp["b2"], residual=x,
                   out_dtype=jnp.float32, caps=caps)

    xn = layernorm(x, params["lnf_g"], params["lnf_b"], caps)
    logits = linear(xn, params["w_out"], out_dtype=jnp.float32, caps=caps)
    logits = logits[:, :V]                                    # drop vocab padding
    return logits.reshape(B, T, V)


# ------------------------------ deterministic init ---------------------------

def init_params(key, cfg):
    D, V = cfg["embed_dim"], cfg["vocab_size"]
    VD, F, L, H = cfg["value_dim"], cfg["ffn_dim"], cfg["layers"], cfg["heads"]
    dk = D // H
    ks = iter(jax.random.split(key, 2 + 7 * L))

    def lin(k, out_f, in_f):           # nn.Linear init per _init_weights (std=0.02)
        return 0.02 * jax.random.normal(k, (out_f, in_f), jnp.float32)

    def prep(w):                        # PyTorch (out,in) -> (in,out) bf16 for the MXU
        return jnp.asarray(w.T, jnp.bfloat16)

    # pad the vocab projection at init so the logits matmul always has a clean tile
    Vp = V if V <= 256 else _round_up(V, 256)
    w_out = (D ** -0.5) * jax.random.normal(next(ks), (V, D), jnp.float32)
    if Vp != V:
        w_out = jnp.pad(w_out, ((0, Vp - V), (0, 0)))

    params = {
        # Embedding(): normal(0, D**-0.5)
        "embed": (D ** -0.5) * jax.random.normal(next(ks), (V, D), jnp.float32),
        "lnf_g": jnp.ones((D,), jnp.float32),
        "lnf_b": jnp.zeros((D,), jnp.float32),
        "w_out": prep(w_out),
        "layers": [],
    }
    kscale = dk ** -0.5
    for _ in range(L):
        wq, wk = lin(next(ks), D, D), lin(next(ks), D, D)
        wv, wg = lin(next(ks), VD, D), lin(next(ks), VD, D)
        wo, w1, w2 = lin(next(ks), D, VD), lin(next(ks), F, D), lin(next(ks), D, F)
        # fuse q|k|v|g and fold the dk**-0.5 k-scaling into wk (bias is zero here)
        w_qkvg = jnp.concatenate([wq, wk * kscale, wv, wg], axis=0)   # (2D+2VD, D)
        lp = {
            "ln1_g": jnp.ones((D,), jnp.float32), "ln1_b": jnp.zeros((D,), jnp.float32),
            "ln2_g": jnp.ones((D,), jnp.float32), "ln2_b": jnp.zeros((D,), jnp.float32),
            "w_qkvg": prep(w_qkvg), "b_qkvg": jnp.zeros((2 * D + 2 * VD,), jnp.float32),
            "w_o": prep(wo), "b_o": jnp.zeros((D,), jnp.float32),
            "w1": prep(w1), "b1": jnp.zeros((F,), jnp.float32),
            "w2": prep(w2), "b2": jnp.zeros((D,), jnp.float32),
        }
        params["layers"].append(lp)
    return params


if __name__ == "__main__":
    # small "retnet" config: D=32, value_dim=2*D, 2 heads, 2 layers, ffn=64, vocab=64
    cfg = dict(vocab_size=64, embed_dim=32, value_dim=64, ffn_dim=64, heads=2, layers=2)
    key = jax.random.PRNGKey(0)
    pkey, ikey = jax.random.split(key)
    params = init_params(pkey, cfg)
    input_ids = jax.random.randint(ikey, (2, 8), 0, cfg["vocab_size"], dtype=jnp.int32)

    logits = retnet_forward(params, cfg, input_ids)
    jax.block_until_ready(logits)
    assert logits.shape == (2, 8, cfg["vocab_size"]) and logits.dtype == jnp.float32
    print("KERNEL_OK")
</pallas_src>

<mosaic_0001>
module attributes {stable_mosaic.version = 11 : i64} {
  func.func @_ln_kernel(%arg0: i32, %arg1: memref<16x32xf32, #tpu.memory_space<vmem>>, %arg2: memref<1x32xf32, #tpu.memory_space<vmem>>, %arg3: memref<1x32xf32, #tpu.memory_space<vmem>>, %arg4: memref<16x32xbf16, #tpu.memory_space<vmem>>) attributes {dimension_semantics = [#tpu.dimension_semantics<parallel>], iteration_bounds = array<i64: 1>, scalar_prefetch = 0 : i64, scratch_operands = 0 : i64, tpu.core_type = #tpu.core_type<tc>, window_params = [{transform_indices = @transform_0, window_bounds = array<i64: 16, 32>}, {pipeline_mode = #tpu.pipeline_mode<synchronous>, transform_indices = @transform_1, window_bounds = array<i64: 1, 32>}, {pipeline_mode = #tpu.pipeline_mode<synchronous>, transform_indices = @transform_2, window_bounds = array<i64: 1, 32>}, {transform_indices = @transform_3, window_bounds = array<i64: 16, 32>}]} {
    %c0 = arith.constant 0 : index
    %c0_0 = arith.constant 0 : index
    %0 = vector.load %arg1[%c0, %c0_0] : memref<16x32xf32, #tpu.memory_space<vmem>>, vector<16x32xf32>
    %cst = arith.constant dense<0.000000e+00> : vector<16xf32>
    %1 = vector.multi_reduction <add>, %0, %cst [1] : vector<16x32xf32> to vector<16xf32>
    %2 = vector.shape_cast %1 : vector<16xf32> to vector<16x1xf32>
    %cst_1 = arith.constant 3.200000e+01 : f32
    %3 = vector.broadcast %cst_1 : f32 to vector<16x1xf32>
    %4 = arith.divf %2, %3 : vector<16x1xf32>
    %5 = vector.broadcast %4 : vector<16x1xf32> to vector<16x32xf32>
    %6 = arith.subf %0, %5 : vector<16x32xf32>
    %7 = vector.broadcast %4 : vector<16x1xf32> to vector<16x32xf32>
    %8 = arith.subf %0, %7 : vector<16x32xf32>
    %9 = arith.mulf %6, %8 : vector<16x32xf32>
    %cst_2 = arith.constant dense<0.000000e+00> : vector<16xf32>
    %10 = vector.multi_reduction <add>, %9, %cst_2 [1] : vector<16x32xf32> to vector<16xf32>
    %11 = vector.shape_cast %10 : vector<16xf32> to vector<16x1xf32>
    %cst_3 = arith.constant 3.200000e+01 : f32
    %12 = vector.broadcast %cst_3 : f32 to vector<16x1xf32>
    %13 = arith.divf %11, %12 : vector<16x1xf32>
    %14 = vector.broadcast %4 : vector<16x1xf32> to vector<16x32xf32>
    %15 = arith.subf %0, %14 : vector<16x32xf32>
    %cst_4 = arith.constant 9.99999974E-6 : f32
    %16 = vector.broadcast %cst_4 : f32 to vector<16x1xf32>
    %17 = arith.addf %13, %16 : vector<16x1xf32>
    %18 = math.rsqrt %17 : vector<16x1xf32>
    %19 = vector.broadcast %18 : vector<16x1xf32> to vector<16x32xf32>
    %20 = arith.mulf %15, %19 : vector<16x32xf32>
    %c0_5 = arith.constant 0 : index
    %c0_6 = arith.constant 0 : index
    %21 = vector.load %arg2[%c0_5, %c0_6] : memref<1x32xf32, #tpu.memory_space<vmem>>, vector<1x32xf32>
    %22 = vector.broadcast %21 : vector<1x32xf32> to vector<16x32xf32>
    %23 = arith.mulf %20, %22 : vector<16x32xf32>
    %c0_7 = arith.constant 0 : index
    %c0_8 = arith.constant 0 : index
    %24 = vector.load %arg3[%c0_7, %c0_8] : memref<1x32xf32, #tpu.memory_space<vmem>>, vector<1x32xf32>
    %25 = vector.broadcast %24 : vector<1x32xf32> to vector<16x32xf32>
    %26 = arith.addf %23, %25 : vector<16x32xf32>
    %27 = arith.truncf %26 : vector<16x32xf32> to vector<16x32xbf16>
    %c0_9 = arith.constant 0 : index
    %c0_10 = arith.constant 0 : index
    %28 = vector.load %arg4[%c0_9, %c0_10] : memref<16x32xbf16, #tpu.memory_space<vmem>>, vector<16x32xbf16>
    tpu.vector_store %arg4[%c0_9, %c0_10], %27 {strides = array<i32>} : memref<16x32xbf16, #tpu.memory_space<vmem>>, vector<16x32xbf16>,
    return
  }
  func.func @transform_0(%arg0: i32) -> (i32, i32) {
    %c0_i32 = arith.constant 0 : i32
    %c0_i32_0 = arith.constant 0 : i32
    return %arg0, %c0_i32 : i32, i32
  }
  func.func @transform_1(%arg0: i32) -> (i32, i32) {
    %c0_i32 = arith.constant 0 : i32
    %c0_i32_0 = arith.constant 0 : i32
    %c0_i32_1 = arith.constant 0 : i32
    return %c0_i32, %c0_i32_0 : i32, i32
  }
  func.func @transform_2(%arg0: i32) -> (i32, i32) {
    %c0_i32 = arith.constant 0 : i32
    %c0_i32_0 = arith.constant 0 : i32
    %c0_i32_1 = arith.constant 0 : i32
    return %c0_i32, %c0_i32_0 : i32, i32
  }
  func.func @transform_3(%arg0: i32) -> (i32, i32) {
    %c0_i32 = arith.constant 0 : i32
    %c0_i32_0 = arith.constant 0 : i32
    return %arg0, %c0_i32 : i32, i32
  }
}

</mosaic_0001>

<llo_original>
// kernel: tpu_custom_call.1
$region0: #{tpu_custom_call.1}
  #allocation0 [shape = 'u32[]', space=smem, size = 0x4, offset = 0x4, fixed_abs, tag = 'smem constant byte address 0x4 - core index']
  #allocation1 [shape = 'u32[144,128]{1,0:T(1,128)}', space=vmem, size = 0x12000, scoped, tag = 'internal scratch']
  %s0 = inlined_call_operand.hbm [shape: f32[16,32], index: 0, kind: input, shape index: {}]
  %s1 = inlined_call_operand.vmem [shape: f32[1,32], index: 1, kind: input, shape index: {}]
  %s2 = inlined_call_operand.vmem [shape: f32[1,32], index: 2, kind: input, shape index: {}]
  %s3 = inlined_call_operand.hbm [shape: bf16[16,32], index: 3, kind: output, shape index: {}]
  %s4 = sld [smem:[#allocation0]]
  $region26: #{tpu_custom_call.1} parent=0
    _
  %s6 = ssub.s32 1, %s4
  %s7 = scalar_select 0, %s6, %s4
  $region1: #{tpu_custom_call.1} parent=0
    #allocation2 [shape = 'u8[8192]{0}', space=vmem, size = 0x2000, scoped, tag = 'input window, operand 0, single buffered']
    #allocation3 [shape = 's32[1]{0}', space=sflag, size = 0x4, scoped, tag = 'scoped memory for tpu_custom_call.1']
    #allocation4 [shape = 's32[1]{0}', space=sflag, size = 0x4, scoped, tag = 'scoped memory for tpu_custom_call.1']
    #allocation5 [shape = 'u8[4096]{0}', space=vmem, size = 0x1000, scoped, tag = 'output window, operand 0, single buffered']
    %8 = vsyncpa [#allocation3], 0
    %9 = vsyncpa [#allocation4], 0
    // Predicated region
    $region2: #{tpu_custom_call.1} parent=1 // pred_check
      _
    $region3: #{tpu_custom_call.1} parent=1 // pred_check_branch
      %11 = sbr.rel (0) target = $region5
    $region4: #{tpu_custom_call.1} parent=1 // pred_region
      %s13 = ssub.s32 256, 256
      %14 = vsyncadd [#allocation3], %s13
      %s15 = sshll.u32 [#allocation2], 4
      %s16 = int_to_ptr.vmem [resolvable:$true] %s15
      %21 = dma.hbm_to_vmem [thread:$0]  %s0, 256, %s16, [#allocation3], 128, 128, 8
    $region5: #{tpu_custom_call.1} parent=1 // pred_fallthru
      _
    // Predicated region
    $region6: #{tpu_custom_call.1} parent=1 // pred_check
      _
    $region7: #{tpu_custom_call.1} parent=1 // pred_check_branch
      %23 = sbr.rel (0) target = $region9
    $region8: #{tpu_custom_call.1} parent=1 // pred_region
      _
    $region9: #{tpu_custom_call.1} parent=1 // pred_fallthru
      _
    // Predicated region
    $region10: #{tpu_custom_call.1} parent=1 // pred_check
      _
    $region11: #{tpu_custom_call.1} parent=1 // pred_check_branch
      %25 = sbr.rel (0) target = $region13
    $region12: #{tpu_custom_call.1} parent=1 // pred_region
      _
    $region13: #{tpu_custom_call.1} parent=1 // pred_fallthru
      _
    // Predicated region
    $region14: #{tpu_custom_call.1} parent=1 // pred_check
      _
    $region15: #{tpu_custom_call.1} parent=1 // pred_check_branch
      %27 = sbr.rel (0) target = $region17
    $region16: #{tpu_custom_call.1} parent=1 // pred_region
      %28 = dma.done [#allocation3], 256
    $region17: #{tpu_custom_call.1} parent=1 // pred_fallthru
      _
    %v29 = vld [vmem:[#allocation2] sm:$0xff]
    %v30 = vld [vmem:[#allocation2 + $0x8] sm:$0xff]
    %vm31 = vcmask 261120
    %v32 = vsel %vm31, %v29, 0.0
    %33 = vadd.xlane.f32.xlu0 %v32
    %v34 = vpop.xlane.xlu0 %33
    %v35 = vsel %vm31, %v30, 0.0
    %36 = vadd.xlane.f32.xlu0 %v35
    %v37 = vpop.xlane.xlu0 %36
    %v38 = vrcp.pop 32.0
    %v39 = vmul.f32 %v34, %v38
    %v40 = vmul.f32 %v37, %v38
    %v41 = vsub.f32 %v29, %v39
    %v42 = vsub.f32 %v30, %v40
    %v43 = vmul.f32 %v41, %v41
    %v44 = vmul.f32 %v42, %v42
    %v45 = vsel %vm31, %v43, 0.0
    %46 = vadd.xlane.f32.xlu0 %v45
    %v47 = vpop.xlane.xlu0 %46
    %v48 = vsel %vm31, %v44, 0.0
    %49 = vadd.xlane.f32.xlu0 %v48
    %v50 = vpop.xlane.xlu0 %49
    %v51 = vmul.f32 %v47, %v38
    %v52 = vmul.f32 %v50, %v38
    %v53 = vadd.f32 %v51, 1e-05
    %v54 = vadd.f32 %v52, 1e-05
    %v55 = vrsqrt.pop %v53
    %v56 = vrsqrt.pop %v54
    %v57 = vmul.f32 %v41, %v55
    %v58 = vmul.f32 %v42, %v56
    %v59 = vld [vmem:[%s1] sm:$0x1]
    %v61 = vlaneseq
    %v62 = vshrl.u32 %v61, 7
    %v63 = vsub.s32 0, %v62
    %v64 = vrot.slane %v59, %v63
    %v66 = vmul.f32 %v57, %v64
    %v67 = vmul.f32 %v58, %v64
    %v68 = vld [vmem:[%s2] sm:$0x1]
    %v70 = vlaneseq
    %v71 = vshrl.u32 %v70, 7
    %v72 = vsub.s32 0, %v71
    %v73 = vrot.slane %v68, %v72
    %v75 = vadd.f32 %v66, %v73
    %v76 = vadd.f32 %v67, %v73
    %v77 = vpack.c.bf16 %v76, %v75
    %v79 = vunpack.c.l.b16 %v77
    %v80 = vunpack.c.h.b16 %v77
    %v81 = vpack.c.b16 %v79, %v79
    %v82 = vpack.c.b16 %v80, %v80
    %vm85 = vcmask 257024
    %86 = vst.msk [vmem:[#allocation5] sm:$0xf] %vm85, %v81
    %87 = vst.msk [vmem:[#allocation5 + $0x4] sm:$0xf] %vm85, %v82
    // Predicated region
    $region18: #{tpu_custom_call.1} parent=1 // pred_check
      _
    $region19: #{tpu_custom_call.1} parent=1 // pred_check_branch
      %89 = sbr.rel (0) target = $region21
    $region20: #{tpu_custom_call.1} parent=1 // pred_region
      %s91 = ssub.s32 128, 128
      %92 = vsyncadd [#allocation4], %s91
      %s93 = sshll.u32 [#allocation5], 4
      %s94 = int_to_ptr.vmem [resolvable:$true] %s93
      %99 = dma.vmem_to_hbm [thread:$0]  %s94, 128, %s3, [#allocation4], 64, 64, 4
    $region21: #{tpu_custom_call.1} parent=1 // pred_fallthru
      _
    // Predicated region
    $region22: #{tpu_custom_call.1} parent=1 // pred_check
      _
    $region23: #{tpu_custom_call.1} parent=1 // pred_check_branch
      %101 = sbr.rel (0) target = $region25
    $region24: #{tpu_custom_call.1} parent=1 // pred_region
      %102 = dma.done [#allocation4], 128
    $region25: #{tpu_custom_call.1} parent=1 // pred_fallthru
      _
    %103 = vsyncpa [#allocation3], 1
    %104 = vsyncpa [#allocation4], 1

</llo_original>
